<compile_context>
chip_gen: v5e
topology: v5e:2x2
jax: 0.10.0
libtpu: 0.0.40
codegen_flags: <defaults>
</compile_context>

<pallas_src>
import jax
import jax.numpy as jnp
from jax.experimental import pallas as pl
from jax.experimental.pallas import tpu as pltpu


def two_linear_kernel(x_ref, w1t_ref, w2t_ref, o_ref):
    # x_ref:   (tb, D_in)      batch tile
    # w1t_ref: (D_in, H)       fc1.weight^T, resident across all grid steps
    # w2t_ref: (H, N_pad)      fc2.weight^T zero-padded to a 128-lane multiple
    # o_ref:   (tb, N_pad)     lane-dense output tile
    h = jnp.dot(x_ref[...], w1t_ref[...], preferred_element_type=jnp.float32)
    # Precision note (documented choice): only downcast the fc1 f32 accumulator
    # when the weights are lower precision (e.g. bf16); with f32 weights no-op.
    if w2t_ref.dtype != jnp.float32:
        h = h.astype(w2t_ref.dtype)
    o_ref[...] = jnp.dot(h, w2t_ref[...],
                         preferred_element_type=jnp.float32).astype(o_ref.dtype)


def fused_linear_kernel(x_ref, wf_ref, o_ref):
    # x_ref: (tb, D_in); wf_ref: (D_in, N_pad) = W1^T @ W2^T (padded); o_ref: (tb, N_pad)
    o_ref[...] = jnp.dot(x_ref[...], wf_ref[...],
                         preferred_element_type=jnp.float32).astype(o_ref.dtype)


def _auto_batch_tile(B, per_row_bytes, fixed_bytes, budget_bytes=20 * 1024 * 1024):
    """Largest batch tile whose pipelined VMEM footprint fits a conservative budget
    (safe for v7x's smaller 64 MiB VMEM / 32 MiB default scoped limit)."""
    candidates = [B] + [t for t in (512, 256, 128, 64, 32, 16, 8) if t < B]
    for tb in candidates:
        if fixed_bytes + tb * per_row_bytes <= budget_bytes:
            return tb
    return candidates[-1]


def two_linear_layers(x, w1, w2, *, tb=None, fuse_weights=True):
    """x: (B, D_in); w1: (H, D_in) = fc1.weight; w2: (D_out, H) = fc2.weight."""
    B, D_in = x.shape
    H, d_in2 = w1.shape
    D_out, h2 = w2.shape
    assert d_in2 == D_in and h2 == H

    # --- weight prep (do once at load time in production) --------------------
    # Lane-dense output: pad D_out up to a multiple of 128 with zero columns.
    N_pad = ((D_out + 127) // 128) * 128
    w1t = w1.T                                                     # (D_in, H)
    w2t_pad = jnp.zeros((H, N_pad), w2.dtype).at[:, :D_out].set(w2.T)
    if fuse_weights:
        # No bias / no activation -> the two linears collapse to one matmul.
        w_fused = jnp.dot(w1t, w2t_pad,
                          preferred_element_type=jnp.float32).astype(w1.dtype)

    # --- batch tile selection -------------------------------------------------
    isz = jnp.dtype(x.dtype).itemsize
    wsz = jnp.dtype(w1.dtype).itemsize
    if fuse_weights:
        fixed = 2 * D_in * N_pad * wsz                 # fused weight (double-buffered)
        per_row = 2 * (D_in + N_pad) * isz             # x + out tiles (double-buffered)
    else:
        fixed = 2 * (D_in * H + H * N_pad) * wsz       # both weights (double-buffered)
        per_row = 2 * (D_in + N_pad) * isz + H * 4     # + live f32 intermediate h
    if tb is None:
        # NOTE(v7x): pass tb=B//2 (or smaller) to get >=2 'parallel' grid steps so
        # both TensorCores get work; on v5e/v6e (1 TC) one max-size tile is best.
        tb = _auto_batch_tile(B, per_row, fixed)

    Bp = pl.cdiv(B, tb) * tb
    x_in = x if Bp == B else jnp.pad(x, ((0, Bp - B), (0, 0)))

    # --- specs ------------------------------------------------------------------
    x_spec = pl.BlockSpec((tb, D_in), lambda i: (i, 0))
    out_spec = pl.BlockSpec((tb, N_pad), lambda i: (i, 0))
    if fuse_weights:
        kernel = fused_linear_kernel
        # Weight index_map is constant -> Pallas fetches it once. At large weight
        # sizes, pipeline_mode=pl.Buffered(1) on this spec halves its VMEM cost.
        in_specs = [x_spec, pl.BlockSpec((D_in, N_pad), lambda i: (0, 0))]
        args = (x_in, w_fused)
        flops = 2 * Bp * D_in * N_pad
        w_bytes = (D_in * N_pad) * wsz
    else:
        kernel = two_linear_kernel
        in_specs = [
            x_spec,
            pl.BlockSpec((D_in, H), lambda i: (0, 0)),
            pl.BlockSpec((H, N_pad), lambda i: (0, 0)),
        ]
        args = (x_in, w1t, w2t_pad)
        flops = 2 * Bp * (D_in * H + H * N_pad)
        w_bytes = (D_in * H + H * N_pad) * wsz

    out_padded = pl.pallas_call(
        kernel,
        out_shape=jax.ShapeDtypeStruct((Bp, N_pad), x.dtype),
        grid_spec=pltpu.PrefetchScalarGridSpec(
            num_scalar_prefetch=0,
            grid=(Bp // tb,),
            in_specs=in_specs,
            out_specs=out_spec,
        ),
        compiler_params=pltpu.CompilerParams(
            dimension_semantics=("parallel",),
            vmem_limit_bytes=32 * 1024 * 1024,
        ),
        cost_estimate=pl.CostEstimate(
            flops=flops,
            transcendentals=0,
            bytes_accessed=Bp * D_in * isz + w_bytes + Bp * N_pad * isz,
        ),
    )(*args)

    # Strip the batch pad and the lane pad added for dense stores.
    return out_padded[:B, :D_out]


def two_linear_layers_ref(x, w1, w2):
    return (x @ w1.T) @ w2.T


if __name__ == "__main__":
    # Small shapes consistent with the module: input_dim=32, hidden_dim=64, output_dim=16
    B, D_in, H, D_out = 16, 32, 64, 16

    key = jax.random.PRNGKey(0)
    kx, k1, k2 = jax.random.split(key, 3)

    x = jax.random.normal(kx, (B, D_in), dtype=jnp.float32)
    w1 = jax.random.uniform(k1, (H, D_in), dtype=jnp.float32,
                            minval=-1.0 / jnp.sqrt(D_in), maxval=1.0 / jnp.sqrt(D_in))
    w2 = jax.random.uniform(k2, (D_out, H), dtype=jnp.float32,
                            minval=-1.0 / jnp.sqrt(H), maxval=1.0 / jnp.sqrt(H))

    ref = two_linear_layers_ref(x, w1, w2)

    # Fused path (default): single matmul with precomputed W1^T @ W2^T.
    out_fused = jax.block_until_ready(two_linear_layers(x, w1, w2, fuse_weights=True))
    # Faithful two-matmul path (for when an activation is added between layers).
    out_2mm = jax.block_until_ready(two_linear_layers(x, w1, w2, fuse_weights=False))

    assert out_fused.shape == (B, D_out)
    assert out_2mm.shape == (B, D_out)
    assert jnp.allclose(out_2mm, ref, atol=1e-5, rtol=1e-5), "two-matmul path mismatch"
    assert jnp.allclose(out_fused, ref, atol=1e-5, rtol=1e-5), "fused path mismatch"

    print("KERNEL_OK")
</pallas_src>

<mosaic_0001>
module attributes {stable_mosaic.version = 11 : i64} {
  func.func @fused_linear_kernel(%arg0: i32, %arg1: memref<16x32xf32, #tpu.memory_space<vmem>>, %arg2: memref<32x128xf32, #tpu.memory_space<vmem>>, %arg3: memref<16x128xf32, #tpu.memory_space<vmem>>) attributes {dimension_semantics = [#tpu.dimension_semantics<parallel>], iteration_bounds = array<i64: 1>, scalar_prefetch = 0 : i64, scratch_operands = 0 : i64, tpu.core_type = #tpu.core_type<tc>, window_params = [{transform_indices = @transform_0, window_bounds = array<i64: 16, 32>}, {pipeline_mode = #tpu.pipeline_mode<synchronous>, transform_indices = @transform_1, window_bounds = array<i64: 32, 128>}, {transform_indices = @transform_2, window_bounds = array<i64: 16, 128>}]} {
    %c0 = arith.constant 0 : index
    %c0_0 = arith.constant 0 : index
    %0 = vector.load %arg1[%c0, %c0_0] : memref<16x32xf32, #tpu.memory_space<vmem>>, vector<16x32xf32>
    %c0_1 = arith.constant 0 : index
    %c0_2 = arith.constant 0 : index
    %1 = vector.load %arg2[%c0_1, %c0_2] : memref<32x128xf32, #tpu.memory_space<vmem>>, vector<32x128xf32>
    %cst = arith.constant dense<0.000000e+00> : vector<16x128xf32>
    %2 = tpu.matmul %0, %1, %cst {dimension_numbers = #tpu.dot_dimension_numbers<[1], [0], [0], [1], [0, 0, 1, 1], [], []>} : vector<16x32xf32>, vector<32x128xf32>, vector<16x128xf32> -> vector<16x128xf32>
    %c0_3 = arith.constant 0 : index
    %c0_4 = arith.constant 0 : index
    %3 = vector.load %arg3[%c0_3, %c0_4] : memref<16x128xf32, #tpu.memory_space<vmem>>, vector<16x128xf32>
    tpu.vector_store %arg3[%c0_3, %c0_4], %2 {strides = array<i32>} : memref<16x128xf32, #tpu.memory_space<vmem>>, vector<16x128xf32>,
    return
  }
  func.func @transform_0(%arg0: i32) -> (i32, i32) {
    %c0_i32 = arith.constant 0 : i32
    %c0_i32_0 = arith.constant 0 : i32
    return %arg0, %c0_i32 : i32, i32
  }
  func.func @transform_1(%arg0: i32) -> (i32, i32) {
    %c0_i32 = arith.constant 0 : i32
    %c0_i32_0 = arith.constant 0 : i32
    %c0_i32_1 = arith.constant 0 : i32
    return %c0_i32, %c0_i32_0 : i32, i32
  }
  func.func @transform_2(%arg0: i32) -> (i32, i32) {
    %c0_i32 = arith.constant 0 : i32
    %c0_i32_0 = arith.constant 0 : i32
    return %arg0, %c0_i32 : i32, i32
  }
}

</mosaic_0001>

<llo_original>
// kernel: tpu_custom_call.1
$region0: #{tpu_custom_call.1}
  #allocation0 [shape = 'u32[]', space=smem, size = 0x4, offset = 0x4, fixed_abs, tag = 'smem constant byte address 0x4 - core index']
  #allocation1 [shape = 'u32[72,128]{1,0:T(1,128)}', space=vmem, size = 0x9000, scoped, tag = 'internal scratch']
  %s0 = inlined_call_operand.hbm [shape: f32[16,32], index: 0, kind: input, shape index: {}]
  %s1 = inlined_call_operand.hbm [shape: f32[32,128], index: 1, kind: input, shape index: {}]
  %s2 = inlined_call_operand.hbm [shape: f32[16,128], index: 2, kind: output, shape index: {}]
  %s3 = sld [smem:[#allocation0]]
  $region26: #{tpu_custom_call.1} parent=0
    _
  %s5 = ssub.s32 1, %s3
  %s6 = scalar_select 0, %s5, %s3
  $region1: #{tpu_custom_call.1} parent=0
    #allocation2 [shape = 'u8[8192]{0}', space=vmem, size = 0x2000, scoped, tag = 'input window, operand 0, single buffered']
    #allocation3 [shape = 's32[1]{0}', space=sflag, size = 0x4, scoped, tag = 'scoped memory for tpu_custom_call.1']
    #allocation4 [shape = 's32[1]{0}', space=sflag, size = 0x4, scoped, tag = 'scoped memory for tpu_custom_call.1']
    #allocation5 [shape = 'u8[16384]{0}', space=vmem, size = 0x4000, scoped, tag = 'input window, operand 1, single buffered']
    #allocation6 [shape = 's32[1]{0}', space=sflag, size = 0x4, scoped, tag = 'scoped memory for tpu_custom_call.1']
    #allocation7 [shape = 'u8[8192]{0}', space=vmem, size = 0x2000, scoped, tag = 'output window, operand 0, single buffered']
    %7 = vsyncpa [#allocation3], 0
    %8 = vsyncpa [#allocation6], 0
    %9 = vsyncpa [#allocation4], 0
    // Predicated region
    $region2: #{tpu_custom_call.1} parent=1 // pred_check
      _
    $region3: #{tpu_custom_call.1} parent=1 // pred_check_branch
      %11 = sbr.rel (0) target = $region5
    $region4: #{tpu_custom_call.1} parent=1 // pred_region
      %13 = vsyncadd [#allocation3], 0
      %s14 = sshll.u32 %s0, 4
      %s15 = int_to_ptr.hbm [resolvable:$true] %s14
      %s16 = sshll.u32 [#allocation2], 4
      %s17 = int_to_ptr.vmem [resolvable:$true] %s16
      %22 = dma.hbm_to_vmem [thread:$0]  %s15, 256, %s17, [#allocation3], 128, 128, 8
    $region5: #{tpu_custom_call.1} parent=1 // pred_fallthru
      _
    // Predicated region
    $region6: #{tpu_custom_call.1} parent=1 // pred_check
      _
    $region7: #{tpu_custom_call.1} parent=1 // pred_check_branch
      %24 = sbr.rel (0) target = $region9
    $region8: #{tpu_custom_call.1} parent=1 // pred_region
      %26 = vsyncadd [#allocation6], 0
      %s27 = sshll.u32 %s1, 4
      %s28 = int_to_ptr.hbm [resolvable:$true] %s27
      %s29 = sshll.u32 [#allocation5], 4
      %s30 = int_to_ptr.vmem [resolvable:$true] %s29
      %35 = dma.hbm_to_vmem [thread:$0]  %s28, 512, %s30, [#allocation6], 128, 128, 8
    $region9: #{tpu_custom_call.1} parent=1 // pred_fallthru
      _
    // Predicated region
    $region10: #{tpu_custom_call.1} parent=1 // pred_check
      _
    $region11: #{tpu_custom_call.1} parent=1 // pred_check_branch
      %37 = sbr.rel (0) target = $region13
    $region12: #{tpu_custom_call.1} parent=1 // pred_region
      %39 = dma.done [#allocation3], 256
    $region13: #{tpu_custom_call.1} parent=1 // pred_fallthru
      _
    // Predicated region
    $region14: #{tpu_custom_call.1} parent=1 // pred_check
      _
    $region15: #{tpu_custom_call.1} parent=1 // pred_check_branch
      %41 = sbr.rel (0) target = $region17
    $region16: #{tpu_custom_call.1} parent=1 // pred_region
      %43 = dma.done [#allocation6], 512
    $region17: #{tpu_custom_call.1} parent=1 // pred_fallthru
      _
    %v44 = vld [vmem:[#allocation2] sm:$0xff]
    %v45 = vld [vmem:[#allocation2 + $0x8] sm:$0xff]
    %v46 = vld [vmem:[#allocation5] sm:$0xff]
    %v47 = vld [vmem:[#allocation5 + $0x8] sm:$0xff]
    %v48 = vld [vmem:[#allocation5 + $0x10] sm:$0xff]
    %v49 = vld [vmem:[#allocation5 + $0x18] sm:$0xff]
    %vm50 = vcmask 261120
    %v52 = vsel %vm50, %v44, 0
    %v55 = vsel %vm50, %v45, 0
    %57 = vmatpush.msra.mxu0 0.0
    %58 = vmatpush.msra.mxu0 0.0
    %59 = vmatpush.msra.mxu0 0.0
    %60 = vmatpush.msra.mxu0 0.0
    %61 = vmatpush.msra.mxu0 0.0
    %62 = vmatpush.msra.mxu0 0.0
    %63 = vmatpush.msra.mxu0 0.0
    %64 = vmatpush.msra.mxu0 0.0
    %65 = vmatpush.msra.mxu0 0.0
    %66 = vmatpush.msra.mxu0 0.0
    %67 = vmatpush.msra.mxu0 0.0
    %68 = vmatpush.msra.mxu0 0.0
    %69 = vmatpush.msra.mxu0 %v49
    %70 = vmatpush.msra.mxu0 %v48
    %71 = vmatpush.msra.mxu0 %v47
    %72 = vmatpush.msra.mxu0 %v46
    %73 = vmatmul.f32.gmra.mxu0 %v52
    %v74 = vpop.f32.mrf.mxu0
    %v75 = vadd.f32 0.0, %v74
    %76 = vmatmul.f32.gmra.mxu0 %v55
    %v77 = vpop.f32.mrf.mxu0
    %v78 = vadd.f32 0.0, %v77
    %79 = vdwg.mxu0
    %80 = vst [vmem:[#allocation7] sm:$0xff] %v75
    %81 = vst [vmem:[#allocation7 + $0x8] sm:$0xff] %v78
    // Predicated region
    $region18: #{tpu_custom_call.1} parent=1 // pred_check
      _
    $region19: #{tpu_custom_call.1} parent=1 // pred_check_branch
      %83 = sbr.rel (0) target = $region21
    $region20: #{tpu_custom_call.1} parent=1 // pred_region
      %85 = vsyncadd [#allocation4], 0
      %s86 = sshll.u32 [#allocation7], 4
      %s87 = int_to_ptr.vmem [resolvable:$true] %s86
      %s88 = sshll.u32 %s2, 4
      %s89 = int_to_ptr.hbm [resolvable:$true] %s88
      %94 = dma.vmem_to_hbm [thread:$0]  %s87, 256, %s89, [#allocation4], 128, 128, 8
    $region21: #{tpu_custom_call.1} parent=1 // pred_fallthru
      _
    // Predicated region
    $region22: #{tpu_custom_call.1} parent=1 // pred_check
      _
    $region23: #{tpu_custom_call.1} parent=1 // pred_check_branch
      %96 = sbr.rel (0) target = $region25
    $region24: #{tpu_custom_call.1} parent=1 // pred_region
      %98 = dma.done [#allocation4], 256
    $region25: #{tpu_custom_call.1} parent=1 // pred_fallthru
      _
    %99 = vsyncpa [#allocation3], 1
    %100 = vsyncpa [#allocation6], 1
    %101 = vsyncpa [#allocation4], 1

</llo_original>
